<compile_context>
chip_gen: v7x
topology: tpu7x:2x2x1
jax: 0.10.0
libtpu: 0.0.40
codegen_flags: <defaults>
</compile_context>

<pallas_src>
import numpy as np

import jax
import jax.numpy as jnp
from jax.experimental import pallas as pl
from jax.experimental.pallas import tpu as pltpu

EMBED_DIM = 32        # stands in for roberta hidden_size (=768 in real model)
EMBED_PAD = 128       # lane-dense padded embedding width
NUM_REL = 20          # len(relation_id_map)
NUM_REL_PAD = 128     # lane-dense padded relation width
N_SENT = 8            # number of extracted relation sentences (demo)
BATCH = 2             # number of contexts (demo)

WB_ROWS = EMBED_PAD + 8                    # weights + bias row, sublane-padded
WB_COLS = EMBED_PAD + NUM_REL_PAD          # [W1 | W2] lane-concatenated


# ---------------------------------------------------------------------------
# Fused kernel (one grid axis over sentence-row tiles, accumulator pattern)
#   x_ref   : [TM, EMBED_PAD]           sentence-embedding tile
#   wb_ref  : [WB_ROWS, WB_COLS]        rows 0..127 = [W1p | W2p], row 128 = [b1p | b2p]
#   seg_ref : [B_PAD, TM]               per-context mean weights for this tile
#   rel_ref : [TM, NUM_REL_PAD]         sigmoid relation scores (lane-dense)
#   res_ref : [B_PAD, NUM_REL_PAD]      softmax result (written on last step)
#   acc_ref : [B_PAD, NUM_REL_PAD] f32  running per-context aggregation
# ---------------------------------------------------------------------------
def clutrr_fused_kernel(x_ref, wb_ref, seg_ref, rel_ref, res_ref, acc_ref):
    i = pl.program_id(0)

    @pl.when(i == 0)
    def _():
        acc_ref[...] = jnp.zeros_like(acc_ref)

    x = x_ref[...]                                                   # [TM, D]
    w1 = wb_ref[:EMBED_PAD, :EMBED_PAD]                              # [D, D]
    w2 = wb_ref[:EMBED_PAD, EMBED_PAD:]                              # [D, Rp]
    b1 = wb_ref[EMBED_PAD:EMBED_PAD + 1, :EMBED_PAD]                 # [1, D]
    b2 = wb_ref[EMBED_PAD:EMBED_PAD + 1, EMBED_PAD:]                 # [1, Rp]

    h = jnp.dot(x, w1, preferred_element_type=jnp.float32)           # MXU
    h = jnp.maximum(h + b1, 0.0)                                     # ReLU (VPU)
    y = jnp.dot(h, w2, preferred_element_type=jnp.float32)           # MXU
    y = y + b2
    # sigmoid: EUP exp + approx reciprocal on the wide [TM, 128] path
    rel = pl.reciprocal(1.0 + jnp.exp(-y), approx=True)
    rel_ref[...] = rel

    # per-context weighted-sum aggregation for this tile of sentences
    acc_ref[...] += jnp.dot(seg_ref[...], rel,
                            preferred_element_type=jnp.float32)

    @pl.when(i == pl.num_programs(0) - 1)
    def _():
        agg = acc_ref[...]
        # softmax over the 20 real relation lanes (pad lanes -> -inf -> 0)
        col = jax.lax.broadcasted_iota(jnp.int32, agg.shape, 1)
        masked = jnp.where(col < NUM_REL, agg, jnp.full_like(agg, -jnp.inf))
        m = jnp.max(masked, axis=1, keepdims=True)
        e = jnp.exp(masked - m)
        denom = jnp.sum(e, axis=1, keepdims=True)
        res_ref[...] = e / denom          # exact division (narrow denominator)


# ---------------------------------------------------------------------------
# One-time host-side preparation (numpy) -- nothing here runs per forward call
# ---------------------------------------------------------------------------
def pad_params(params):
    """Pack (W1, b1, W2, b2) into one lane/sublane-dense [136, 256] buffer."""
    w1, b1, w2, b2 = [np.asarray(p, np.float32) for p in params]
    d_in = w1.shape[0]
    wb = np.zeros((WB_ROWS, WB_COLS), np.float32)
    wb[:d_in, :d_in] = w1
    wb[:d_in, EMBED_PAD:EMBED_PAD + NUM_REL] = w2
    wb[EMBED_PAD, :d_in] = b1.reshape(-1)
    wb[EMBED_PAD, EMBED_PAD:EMBED_PAD + NUM_REL] = b2.reshape(-1)
    return jnp.asarray(wb)


def pad_inputs(sentence_embeddings, relation_splits):
    """Pad embeddings to lane-dense [M_PAD, 128] and build the per-context
    mean matrix with numpy (static splits -> plain data, no traced scatters)."""
    x = np.asarray(sentence_embeddings, np.float32)
    n, d = x.shape
    m_pad = max(8, -(-n // 8) * 8)
    if m_pad > 256:                       # keep tiles a multiple of 256 at scale
        m_pad = -(-m_pad // 256) * 256
    x_pad = np.zeros((m_pad, EMBED_PAD), np.float32)
    x_pad[:n, :d] = x

    b = len(relation_splits)
    b_pad = max(8, -(-b // 8) * 8)
    seg = np.zeros((b_pad, m_pad), np.float32)
    for i, (s, e) in enumerate(relation_splits):
        seg[i, s:e] = 1.0 / float(e - s)
    return jnp.asarray(x_pad), jnp.asarray(seg)


# ---------------------------------------------------------------------------
# Jitted forward over pre-padded device arrays: one fused pallas_call.
# ---------------------------------------------------------------------------
@jax.jit
def clutrr_forward(x_pad, wb, seg):
    m_pad = x_pad.shape[0]
    b_pad = seg.shape[0]
    tm = m_pad if m_pad <= 256 else 256          # sentence-row tile
    grid = (m_pad // tm,)

    rel_pad, res_pad = pl.pallas_call(
        clutrr_fused_kernel,
        out_shape=(
            jax.ShapeDtypeStruct((m_pad, NUM_REL_PAD), jnp.float32),
            jax.ShapeDtypeStruct((b_pad, NUM_REL_PAD), jnp.float32),
        ),
        grid_spec=pltpu.PrefetchScalarGridSpec(
            num_scalar_prefetch=0,
            grid=grid,
            in_specs=[
                pl.BlockSpec((tm, EMBED_PAD), lambda i: (i, 0)),
                pl.BlockSpec((WB_ROWS, WB_COLS), lambda i: (0, 0)),
                pl.BlockSpec((b_pad, tm), lambda i: (0, i)),
            ],
            out_specs=(
                pl.BlockSpec((tm, NUM_REL_PAD), lambda i: (i, 0)),
                pl.BlockSpec((b_pad, NUM_REL_PAD), lambda i: (0, 0)),
            ),
            scratch_shapes=[pltpu.VMEM((b_pad, NUM_REL_PAD), jnp.float32)],
        ),
        # single axis carries the per-context accumulator -> reduction axis
        compiler_params=pltpu.CompilerParams(
            dimension_semantics=("arbitrary",)),
    )(x_pad, wb, seg)
    return rel_pad, res_pad


def init_params(key):
    k1, k2, k3, k4 = jax.random.split(key, 4)
    w1 = jax.random.normal(k1, (EMBED_DIM, EMBED_DIM), jnp.float32) * 0.1
    b1 = jax.random.normal(k2, (1, EMBED_DIM), jnp.float32) * 0.01
    w2 = jax.random.normal(k3, (EMBED_DIM, NUM_REL), jnp.float32) * 0.1
    b2 = jax.random.normal(k4, (1, NUM_REL), jnp.float32) * 0.01
    return w1, b1, w2, b2


if __name__ == "__main__":
    key = jax.random.PRNGKey(0)
    k_emb, k_par = jax.random.split(key)

    # stand-in sentence embeddings (what RoBERTa's pooler would produce)
    sentence_embeddings = jax.random.normal(
        k_emb, (N_SENT, EMBED_DIM), jnp.float32)
    params = init_params(k_par)

    # two contexts, each contributing 4 relation sentences
    relation_splits = [(0, 4), (4, 8)]

    # one-time (per model / per static split pattern) host-side preparation
    wb = pad_params(params)
    x_pad, seg = pad_inputs(sentence_embeddings, relation_splits)

    rel_pad, res_pad = clutrr_forward(x_pad, wb, seg)
    rel_pad = jax.block_until_ready(rel_pad)
    res_pad = jax.block_until_ready(res_pad)

    relations = rel_pad[:N_SENT, :NUM_REL]          # [N_SENT, NUM_REL]
    result = res_pad[:len(relation_splits), :NUM_REL]   # [BATCH, NUM_REL]

    # pure-JAX reference check of the fused hot path
    w1, b1, w2, b2 = params
    ref_rel = jax.nn.sigmoid(
        jnp.maximum(sentence_embeddings @ w1 + b1, 0.0) @ w2 + b2)
    ref_res = jax.nn.softmax(
        jnp.stack([jnp.mean(ref_rel[s:e], axis=0) for s, e in relation_splits]),
        axis=1)
    # tolerances loosened slightly for pl.reciprocal(approx=True) on sigmoid
    assert relations.shape == (N_SENT, NUM_REL)
    assert result.shape == (BATCH, NUM_REL)
    assert jnp.allclose(relations, ref_rel, atol=2e-3, rtol=2e-3)
    assert jnp.allclose(result, ref_res, atol=2e-3, rtol=2e-3)
    # exact division on the denominator -> rows sum to 1
    assert jnp.allclose(jnp.sum(result, axis=1), 1.0, atol=1e-5)

    print("KERNEL_OK")
</pallas_src>

<mosaic_0001>
module attributes {stable_mosaic.version = 11 : i64} {
  func.func @clutrr_fused_kernel(%arg0: i32, %arg1: memref<8x128xf32, #tpu.memory_space<vmem>>, %arg2: memref<136x256xf32, #tpu.memory_space<vmem>>, %arg3: memref<8x8xf32, #tpu.memory_space<vmem>>, %arg4: memref<8x128xf32, #tpu.memory_space<vmem>>, %arg5: memref<8x128xf32, #tpu.memory_space<vmem>>, %arg6: memref<8x128xf32, #tpu.memory_space<vmem>>) attributes {dimension_semantics = [#tpu.dimension_semantics<arbitrary>], iteration_bounds = array<i64: 1>, scalar_prefetch = 0 : i64, scratch_operands = 1 : i64, tpu.core_type = #tpu.core_type<tc>, window_params = [{transform_indices = @transform_0, window_bounds = array<i64: 8, 128>}, {pipeline_mode = #tpu.pipeline_mode<synchronous>, transform_indices = @transform_1, window_bounds = array<i64: 136, 256>}, {transform_indices = @transform_2, window_bounds = array<i64: 8, 8>}, {transform_indices = @transform_3, window_bounds = array<i64: 8, 128>}, {pipeline_mode = #tpu.pipeline_mode<synchronous>, transform_indices = @transform_4, window_bounds = array<i64: 8, 128>}]} {
    %c0_i32 = arith.constant 0 : i32
    %0 = arith.cmpi eq, %arg0, %c0_i32 : i32
    %1 = arith.extui %0 : i1 to i32
    %c0_i32_0 = arith.constant 0 : i32
    %2 = arith.cmpi ne, %1, %c0_i32_0 : i32
    scf.if %2 {
      %cst_24 = arith.constant 0.000000e+00 : f32
      %31 = vector.broadcast %cst_24 : f32 to vector<8x128xf32>
      %c0_25 = arith.constant 0 : index
      %c0_26 = arith.constant 0 : index
      %32 = vector.load %arg6[%c0_25, %c0_26] : memref<8x128xf32, #tpu.memory_space<vmem>>, vector<8x128xf32>
      tpu.vector_store %arg6[%c0_25, %c0_26], %31 {strides = array<i32>} : memref<8x128xf32, #tpu.memory_space<vmem>>, vector<8x128xf32>,
    } else {
    }
    %c0 = arith.constant 0 : index
    %c0_1 = arith.constant 0 : index
    %3 = vector.load %arg1[%c0, %c0_1] : memref<8x128xf32, #tpu.memory_space<vmem>>, vector<8x128xf32>
    %c0_2 = arith.constant 0 : index
    %c0_3 = arith.constant 0 : index
    %4 = vector.load %arg2[%c0_2, %c0_3] : memref<136x256xf32, #tpu.memory_space<vmem>>, vector<128x128xf32>
    %c0_4 = arith.constant 0 : index
    %c128 = arith.constant 128 : index
    %5 = vector.load %arg2[%c0_4, %c128] : memref<136x256xf32, #tpu.memory_space<vmem>>, vector<128x128xf32>
    %c128_5 = arith.constant 128 : index
    %c0_6 = arith.constant 0 : index
    %6 = vector.load %arg2[%c128_5, %c0_6] : memref<136x256xf32, #tpu.memory_space<vmem>>, vector<1x128xf32>
    %c128_7 = arith.constant 128 : index
    %c128_8 = arith.constant 128 : index
    %7 = vector.load %arg2[%c128_7, %c128_8] : memref<136x256xf32, #tpu.memory_space<vmem>>, vector<1x128xf32>
    %cst = arith.constant dense<0.000000e+00> : vector<8x128xf32>
    %8 = tpu.matmul %3, %4, %cst {dimension_numbers = #tpu.dot_dimension_numbers<[1], [0], [0], [1], [0, 0, 1, 1], [], []>} : vector<8x128xf32>, vector<128x128xf32>, vector<8x128xf32> -> vector<8x128xf32>
    %9 = vector.broadcast %6 : vector<1x128xf32> to vector<8x128xf32>
    %10 = arith.addf %8, %9 : vector<8x128xf32>
    %cst_9 = arith.constant 0.000000e+00 : f32
    %11 = vector.broadcast %cst_9 : f32 to vector<8x128xf32>
    %12 = arith.maximumf %10, %11 : vector<8x128xf32>
    %cst_10 = arith.constant dense<0.000000e+00> : vector<8x128xf32>
    %13 = tpu.matmul %12, %5, %cst_10 {dimension_numbers = #tpu.dot_dimension_numbers<[1], [0], [0], [1], [0, 0, 1, 1], [], []>} : vector<8x128xf32>, vector<128x128xf32>, vector<8x128xf32> -> vector<8x128xf32>
    %14 = vector.broadcast %7 : vector<1x128xf32> to vector<8x128xf32>
    %15 = arith.addf %13, %14 : vector<8x128xf32>
    %cst_11 = arith.constant 0.000000e+00 : f32
    %16 = vector.broadcast %cst_11 : f32 to vector<8x128xf32>
    %17 = arith.subf %16, %15 : vector<8x128xf32>
    %18 = math.exp %17 : vector<8x128xf32>
    %cst_12 = arith.constant 1.000000e+00 : f32
    %19 = vector.broadcast %cst_12 : f32 to vector<8x128xf32>
    %20 = arith.addf %19, %18 : vector<8x128xf32>
    %21 = tpu.reciprocal %20 {approx = true} : vector<8x128xf32> -> vector<8x128xf32>
    %c0_13 = arith.constant 0 : index
    %c0_14 = arith.constant 0 : index
    %22 = vector.load %arg4[%c0_13, %c0_14] : memref<8x128xf32, #tpu.memory_space<vmem>>, vector<8x128xf32>
    tpu.vector_store %arg4[%c0_13, %c0_14], %21 {strides = array<i32>} : memref<8x128xf32, #tpu.memory_space<vmem>>, vector<8x128xf32>,
    %c0_15 = arith.constant 0 : index
    %c0_16 = arith.constant 0 : index
    %23 = vector.load %arg6[%c0_15, %c0_16] : memref<8x128xf32, #tpu.memory_space<vmem>>, vector<8x128xf32>
    %c0_17 = arith.constant 0 : index
    %c0_18 = arith.constant 0 : index
    %24 = vector.load %arg3[%c0_17, %c0_18] : memref<8x8xf32, #tpu.memory_space<vmem>>, vector<8x8xf32>
    %cst_19 = arith.constant dense<0.000000e+00> : vector<8x128xf32>
    %25 = tpu.matmul %24, %21, %cst_19 {dimension_numbers = #tpu.dot_dimension_numbers<[1], [0], [0], [1], [0, 0, 1, 1], [], []>} : vector<8x8xf32>, vector<8x128xf32>, vector<8x128xf32> -> vector<8x128xf32>
    %26 = arith.addf %23, %25 : vector<8x128xf32>
    %c0_20 = arith.constant 0 : index
    %c0_21 = arith.constant 0 : index
    %27 = vector.load %arg6[%c0_20, %c0_21] : memref<8x128xf32, #tpu.memory_space<vmem>>, vector<8x128xf32>
    tpu.vector_store %arg6[%c0_20, %c0_21], %26 {strides = array<i32>} : memref<8x128xf32, #tpu.memory_space<vmem>>, vector<8x128xf32>,
    %c0_i32_22 = arith.constant 0 : i32
    %28 = arith.cmpi eq, %arg0, %c0_i32_22 : i32
    %29 = arith.extui %28 : i1 to i32
    %c0_i32_23 = arith.constant 0 : i32
    %30 = arith.cmpi ne, %29, %c0_i32_23 : i32
    scf.if %30 {
      %c0_24 = arith.constant 0 : index
      %c0_25 = arith.constant 0 : index
      %31 = vector.load %arg6[%c0_24, %c0_25] : memref<8x128xf32, #tpu.memory_space<vmem>>, vector<8x128xf32>
      %32 = tpu.iota {dimensions = array<i32: 1>} : vector<8x128xi32>
      %c20_i32 = arith.constant 20 : i32
      %33 = vector.broadcast %c20_i32 : i32 to vector<8x128xi32>
      %34 = arith.cmpi slt, %32, %33 : vector<8x128xi32>
      %cst_26 = arith.constant 0xFF800000 : f32
      %35 = vector.broadcast %cst_26 : f32 to vector<8x128xf32>
      %36 = arith.select %34, %31, %35 : vector<8x128xi1>, vector<8x128xf32>
      %cst_27 = arith.constant dense<0xFF800000> : vector<8xf32>
      %37 = vector.multi_reduction <maximumf>, %36, %cst_27 [1] : vector<8x128xf32> to vector<8xf32>
      %38 = vector.shape_cast %37 : vector<8xf32> to vector<8x1xf32>
      %39 = vector.broadcast %38 : vector<8x1xf32> to vector<8x128xf32>
      %40 = arith.subf %36, %39 : vector<8x128xf32>
      %41 = math.exp %40 : vector<8x128xf32>
      %cst_28 = arith.constant dense<0.000000e+00> : vector<8xf32>
      %42 = vector.multi_reduction <add>, %41, %cst_28 [1] : vector<8x128xf32> to vector<8xf32>
      %43 = vector.shape_cast %42 : vector<8xf32> to vector<8x1xf32>
      %44 = vector.broadcast %43 : vector<8x1xf32> to vector<8x128xf32>
      %45 = arith.divf %41, %44 : vector<8x128xf32>
      %c0_29 = arith.constant 0 : index
      %c0_30 = arith.constant 0 : index
      %46 = vector.load %arg5[%c0_29, %c0_30] : memref<8x128xf32, #tpu.memory_space<vmem>>, vector<8x128xf32>
      tpu.vector_store %arg5[%c0_29, %c0_30], %45 {strides = array<i32>} : memref<8x128xf32, #tpu.memory_space<vmem>>, vector<8x128xf32>,
    } else {
    }
    return
  }
  func.func @transform_0(%arg0: i32) -> (i32, i32) {
    %c0_i32 = arith.constant 0 : i32
    %c0_i32_0 = arith.constant 0 : i32
    return %arg0, %c0_i32 : i32, i32
  }
  func.func @transform_1(%arg0: i32) -> (i32, i32) {
    %c0_i32 = arith.constant 0 : i32
    %c0_i32_0 = arith.constant 0 : i32
    %c0_i32_1 = arith.constant 0 : i32
    return %c0_i32, %c0_i32_0 : i32, i32
  }
  func.func @transform_2(%arg0: i32) -> (i32, i32) {
    %c0_i32 = arith.constant 0 : i32
    %c0_i32_0 = arith.constant 0 : i32
    return %c0_i32, %arg0 : i32, i32
  }
  func.func @transform_3(%arg0: i32) -> (i32, i32) {
    %c0_i32 = arith.constant 0 : i32
    %c0_i32_0 = arith.constant 0 : i32
    return %arg0, %c0_i32 : i32, i32
  }
  func.func @transform_4(%arg0: i32) -> (i32, i32) {
    %c0_i32 = arith.constant 0 : i32
    %c0_i32_0 = arith.constant 0 : i32
    %c0_i32_1 = arith.constant 0 : i32
    return %c0_i32, %c0_i32_0 : i32, i32
  }
}

</mosaic_0001>

<llo_original>
// kernel: clutrr_forward.1
$region0: #{clutrr_forward.1}
  #allocation0 [shape = 'u32[]', space=smem, size = 0x4, offset = 0x4, fixed_abs, tag = 'smem constant byte address 0x4 - core index']
  #allocation1 [shape = 'u32[144,128]{1,0:T(1,128)}', space=vmem, size = 0x12000, scoped, tag = 'internal scratch']
  #allocation2 [shape = 'f32[8,128]{1,0:T(8,128)}', space=vmem, size = 0x1000, scoped, tag = 'scratch operand']
  %s0 = inlined_call_operand.hbm [shape: f32[8,128], index: 0, kind: input, shape index: {}]
  %s1 = inlined_call_operand.hbm [shape: f32[136,256], index: 1, kind: input, shape index: {}]
  %s2 = inlined_call_operand.hbm [shape: f32[8,8], index: 2, kind: input, shape index: {}]
  %s3 = inlined_call_operand.hbm [shape: f32[8,128], index: 3, kind: output, shape index: {0}]
  %s4 = inlined_call_operand.hbm [shape: f32[8,128], index: 4, kind: output, shape index: {1}]
  %5 = xla_tuple %s3, %s4
  %s6 = sld [smem:[#allocation0]]
  $region50: #{clutrr_forward.1} parent=0
    _
  %s8 = ssub.s32 1, %s6
  %s9 = scalar_select 0, %s8, %s6
  $region1: #{clutrr_forward.1} parent=0
    #allocation3 [shape = 'u8[4096]{0}', space=vmem, size = 0x1000, scoped, tag = 'input window, operand 0, single buffered']
    #allocation4 [shape = 's32[1]{0}', space=sflag, size = 0x4, scoped, tag = 'scoped memory for clutrr_forward.1']
    #allocation5 [shape = 's32[1]{0}', space=sflag, size = 0x4, scoped, tag = 'scoped memory for clutrr_forward.1']
    #allocation6 [shape = 'u8[139264]{0}', space=vmem, size = 0x22000, scoped, tag = 'input window, operand 1, single buffered']
    #allocation7 [shape = 's32[1]{0}', space=sflag, size = 0x4, scoped, tag = 'scoped memory for clutrr_forward.1']
    #allocation8 [shape = 'u8[4096]{0}', space=vmem, size = 0x1000, scoped, tag = 'input window, operand 2, single buffered']
    #allocation9 [shape = 'u8[4096]{0}', space=vmem, size = 0x1000, scoped, tag = 'output window, operand 0, single buffered']
    #allocation10 [shape = 'u8[4096]{0}', space=vmem, size = 0x1000, scoped, tag = 'output window, operand 1, single buffered']
    #allocation11 [shape = 's32[1]{0}', space=sflag, size = 0x4, scoped, tag = 'scoped memory for clutrr_forward.1']
    %10 = vsyncpa [#allocation4], 0
    %11 = vsyncpa [#allocation7], 0
    %12 = vsyncpa [#allocation5], 0
    %13 = vsyncpa [#allocation11], 0
    // Predicated region
    $region2: #{clutrr_forward.1} parent=1 // pred_check
      _
    $region3: #{clutrr_forward.1} parent=1 // pred_check_branch
      %15 = sbr.rel (0) target = $region5
    $region4: #{clutrr_forward.1} parent=1 // pred_region
      %s17 = ssub.s32 128, 128
      %18 = vsyncadd [#allocation4], %s17
      %s20 = sshll.u32 [#allocation3], 4
      %s21 = int_to_ptr.vmem [resolvable:$true] %s20
      %23 = dma.hbm_to_vmem [thread:$0]  %s0, 128, %s21, [#allocation4]
    $region5: #{clutrr_forward.1} parent=1 // pred_fallthru
      _
    // Predicated region
    $region6: #{clutrr_forward.1} parent=1 // pred_check
      _
    $region7: #{clutrr_forward.1} parent=1 // pred_check_branch
      %25 = sbr.rel (0) target = $region9
    $region8: #{clutrr_forward.1} parent=1 // pred_region
      %s27 = ssub.s32 4352, 4352
      %28 = vsyncadd [#allocation7], %s27
      %s29 = sshll.u32 [#allocation6], 4
      %s30 = int_to_ptr.vmem [resolvable:$true] %s29
      %35 = dma.hbm_to_vmem [thread:$0]  %s1, 4352, %s30, [#allocation7], 256, 256, 16
    $region9: #{clutrr_forward.1} parent=1 // pred_fallthru
      _
    // Predicated region
    $region10: #{clutrr_forward.1} parent=1 // pred_check
      _
    $region11: #{clutrr_forward.1} parent=1 // pred_check_branch
      %37 = sbr.rel (0) target = $region13
    $region12: #{clutrr_forward.1} parent=1 // pred_region
      %s39 = ssub.s32 128, 128
      %40 = vsyncadd [#allocation7], %s39
      %s42 = sshll.u32 [#allocation8], 4
      %s43 = int_to_ptr.vmem [resolvable:$true] %s42
      %45 = dma.hbm_to_vmem [thread:$0]  %s2, 128, %s43, [#allocation7]
    $region13: #{clutrr_forward.1} parent=1 // pred_fallthru
      _
    // Predicated region
    $region14: #{clutrr_forward.1} parent=1 // pred_check
      _
    $region15: #{clutrr_forward.1} parent=1 // pred_check_branch
      %47 = sbr.rel (0) target = $region17
    $region16: #{clutrr_forward.1} parent=1 // pred_region
      %48 = dma.done [#allocation4], 128
    $region17: #{clutrr_forward.1} parent=1 // pred_fallthru
      _
    // Predicated region
    $region18: #{clutrr_forward.1} parent=1 // pred_check
      _
    $region19: #{clutrr_forward.1} parent=1 // pred_check_branch
      %50 = sbr.rel (0) target = $region21
    $region20: #{clutrr_forward.1} parent=1 // pred_region
      %51 = dma.done [#allocation7], 4352
    $region21: #{clutrr_forward.1} parent=1 // pred_fallthru
      _
    // Predicated region
    $region22: #{clutrr_forward.1} parent=1 // pred_check
      _
    $region23: #{clutrr_forward.1} parent=1 // pred_check_branch
      %53 = sbr.rel (0) target = $region25
    $region24: #{clutrr_forward.1} parent=1 // pred_region
      %54 = dma.done [#allocation7], 128
    $region25: #{clutrr_forward.1} parent=1 // pred_fallthru
      _
    %p55 = scmp.eq.s32.totalorder 0, 0
    // Predicated region
    $region26: #{clutrr_forward.1} parent=1 // pred_check
      %p56 = pneg %p55
    $region27: #{clutrr_forward.1} parent=1 // pred_check_branch
      %58 = sbr.rel (%p56) target = $region29
    $region28: #{clutrr_forward.1} parent=1 // pred_region
      %59 = vst [vmem:[#allocation2] sm:$0xff] 0.0
    $region29: #{clutrr_forward.1} parent=1 // pred_fallthru
      _
    %v60 = vld [vmem:[#allocation3] sm:$0xff]
    %v61 = vld [vmem:[#allocation6] sm:$0xff]
    %v62 = vld [vmem:[#allocation6 + $0x10] sm:$0xff]
    %v63 = vld [vmem:[#allocation6 + $0x20] sm:$0xff]
    %v64 = vld [vmem:[#allocation6 + $0x30] sm:$0xff]
    %v65 = vld [vmem:[#allocation6 + $0x40] sm:$0xff]
    %v66 = vld [vmem:[#allocation6 + $0x50] sm:$0xff]
    %v67 = vld [vmem:[#allocation6 + $0x60] sm:$0xff]
    %v68 = vld [vmem:[#allocation6 + $0x70] sm:$0xff]
    %v69 = vld [vmem:[#allocation6 + $0x80] sm:$0xff]
    %v70 = vld [vmem:[#allocation6 + $0x90] sm:$0xff]
    %v71 = vld [vmem:[#allocation6 + $0xa0] sm:$0xff]
    %v72 = vld [vmem:[#allocation6 + $0xb0] sm:$0xff]
    %v73 = vld [vmem:[#allocation6 + $0xc0] sm:$0xff]
    %v74 = vld [vmem:[#allocation6 + $0xd0] sm:$0xff]
    %v75 = vld [vmem:[#allocation6 + $0xe0] sm:$0xff]
    %v76 = vld [vmem:[#allocation6 + $0xf0] sm:$0xff]
    %v77 = vld [vmem:[#allocation6 + $0x8] sm:$0xff]
    %v78 = vld [vmem:[#allocation6 + $0x18] sm:$0xff]
    %v79 = vld [vmem:[#allocation6 + $0x28] sm:$0xff]
    %v80 = vld [vmem:[#allocation6 + $0x38] sm:$0xff]
    %v81 = vld [vmem:[#allocation6 + $0x48] sm:$0xff]
    %v82 = vld [vmem:[#allocation6 + $0x58] sm:$0xff]
    %v83 = vld [vmem:[#allocation6 + $0x68] sm:$0xff]
    %v84 = vld [vmem:[#allocation6 + $0x78] sm:$0xff]
    %v85 = vld [vmem:[#allocation6 + $0x88] sm:$0xff]
    %v86 = vld [vmem:[#allocation6 + $0x98] sm:$0xff]
    %v87 = vld [vmem:[#allocation6 + $0xa8] sm:$0xff]
    %v88 = vld [vmem:[#allocation6 + $0xb8] sm:$0xff]
    %v89 = vld [vmem:[#allocation6 + $0xc8] sm:$0xff]
    %v90 = vld [vmem:[#allocation6 + $0xd8] sm:$0xff]
    %v91 = vld [vmem:[#allocation6 + $0xe8] sm:$0xff]
    %v92 = vld [vmem:[#allocation6 + $0xf8] sm:$0xff]
    %v93 = vld [vmem:[#allocation6 + $0x100] ss:$0 sm:$0xff]
    %v94 = vld [vmem:[#allocation6 + $0x108] ss:$0 sm:$0xff]
    %95 = vmatprep.subr.mxu0 0.0
    %96 = vmatpush1.msra.mxu0 %v61
    %97 = vmatprep.subr.mxu0 0.0
    %98 = vmatpush1.msra.mxu0 %v62
    %99 = vmatprep.subr.mxu0 0.0
    %100 = vmatpush1.msra.mxu0 %v63
    %101 = vmatprep.subr.mxu0 0.0
    %102 = vmatpush1.msra.mxu0 %v64
    %103 = vmatprep.subr.mxu0 0.0
    %104 = vmatpush1.msra.mxu0 %v65
    %105 = vmatprep.subr.mxu0 0.0
    %106 = vmatpush1.msra.mxu0 %v66
    %107 = vmatprep.subr.mxu0 0.0
    %108 = vmatpush1.msra.mxu0 %v67
    %109 = vmatprep.subr.mxu0 0.0
    %110 = vmatpush1.msra.mxu0 %v68
    %111 = vmatprep.subr.mxu0 0.0
    %112 = vmatpush1.msra.mxu0 %v69
    %113 = vmatprep.subr.mxu0 0.0
    %114 = vmatpush1.msra.mxu0 %v70
    %115 = vmatprep.subr.mxu0 0.0
    %116 = vmatpush1.msra.mxu0 %v71
    %117 = vmatprep.subr.mxu0 0.0
    %118 = vmatpush1.msra.mxu0 %v72
    %119 = vmatprep.subr.mxu0 0.0
    %120 = vmatpush1.msra.mxu0 %v73
    %121 = vmatprep.subr.mxu0 0.0
    %122 = vmatpush1.msra.mxu0 %v74
    %123 = vmatprep.subr.mxu0 0.0
    %124 = vmatpush1.msra.mxu0 %v75
    %125 = vmatprep.subr.mxu0 0.0
    %126 = vmatpush1.msra.mxu0 %v76
    %127 = vmatprep.subr.mxu0 0.0
    %128 = vmatpush1.msra.mxu0 0.0
    %129 = vmatprep.subr.mxu0 0.0
    %130 = vmatpush1.msra.mxu0 0.0
    %131 = vmatprep.subr.mxu0 0.0
    %132 = vmatpush1.msra.mxu0 0.0
    %133 = vmatprep.subr.mxu0 0.0
    %134 = vmatpush1.msra.mxu0 0.0
    %135 = vmatprep.subr.mxu0 0.0
    %136 = vmatpush1.msra.mxu0 0.0
    %137 = vmatprep.subr.mxu0 0.0
    %138 = vmatpush1.msra.mxu0 0.0
    %139 = vmatprep.subr.mxu0 0.0
    %140 = vmatpush1.msra.mxu0 0.0
    %141 = vmatprep.subr.mxu0 0.0
    %142 = vmatpush1.msra.mxu0 0.0
    %143 = vmatprep.subr.mxu0 0.0
    %144 = vmatpush1.msra.mxu0 0.0
    %145 = vmatprep.subr.mxu0 0.0
    %146 = vmatpush1.msra.mxu0 0.0
    %147 = vmatprep.subr.mxu0 0.0
    %148 = vmatpush1.msra.mxu0 0.0
    %149 = vmatprep.subr.mxu0 0.0
    %150 = vmatpush1.msra.mxu0 0.0
    %151 = vmatprep.subr.mxu0 0.0
    %152 = vmatpush1.msra.mxu0 0.0
    %153 = vmatprep.subr.mxu0 0.0
    %154 = vmatpush1.msra.mxu0 0.0
    %155 = vmatprep.subr.mxu0 0.0
    %156 = vmatpush1.msra.mxu0 0.0
    %157 = vmatprep.subr.mxu0 0.0
    %158 = vmatpush1.msra.mxu0 0.0
    %159 = vmatprep.mubr.f32.mxu0 0.0
    %160 = vmatmul.mubr.f32.gmra.mrb[0].mxu0 %v60
    %v161 = vpop.f32.mrb[0].mxu0
    %v162 = vadd.f32 %v93, %v161
    %v163 = vpop.f32.mrb[0].mxu0
    %164 = vdwg.mxu0
    %v165 = vmax.f32 %v162, 0.0
    %166 = vmatprep.subr.mxu0 0.0
    %167 = vmatpush1.msra.mxu0 %v77
    %168 = vmatprep.subr.mxu0 0.0
    %169 = vmatpush1.msra.mxu0 %v78
    %170 = vmatprep.subr.mxu0 0.0
    %171 = vmatpush1.msra.mxu0 %v79
    %172 = vmatprep.subr.mxu0 0.0
    %173 = vmatpush1.msra.mxu0 %v80
    %174 = vmatprep.subr.mxu0 0.0
    %175 = vmatpush1.msra.mxu0 %v81
    %176 = vmatprep.subr.mxu0 0.0
    %177 = vmatpush1.msra.mxu0 %v82
    %178 = vmatprep.subr.mxu0 0.0
    %179 = vmatpush1.msra.mxu0 %v83
    %180 = vmatprep.subr.mxu0 0.0
    %181 = vmatpush1.msra.mxu0 %v84
    %182 = vmatprep.subr.mxu0 0.0
    %183 = vmatpush1.msra.mxu0 %v85
    %184 = vmatprep.subr.mxu0 0.0
    %185 = vmatpush1.msra.mxu0 %v86
    %186 = vmatprep.subr.mxu0 0.0
    %187 = vmatpush1.msra.mxu0 %v87
    %188 = vmatprep.subr.mxu0 0.0
    %189 = vmatpush1.msra.mxu0 %v88
    %190 = vmatprep.subr.mxu0 0.0
    %191 = vmatpush1.msra.mxu0 %v89
    %192 = vmatprep.subr.mxu0 0.0
    %193 = vmatpush1.msra.mxu0 %v90
    %194 = vmatprep.subr.mxu0 0.0
    %195 = vmatpush1.msra.mxu0 %v91
    %196 = vmatprep.subr.mxu0 0.0
    %197 = vmatpush1.msra.mxu0 %v92
    %198 = vmatprep.subr.mxu0 0.0
    %199 = vmatpush1.msra.mxu0 0.0
    %200 = vmatprep.subr.mxu0 0.0
    %201 = vmatpush1.msra.mxu0 0.0
    %202 = vmatprep.subr.mxu0 0.0
    %203 = vmatpush1.msra.mxu0 0.0
    %204 = vmatprep.subr.mxu0 0.0
    %205 = vmatpush1.msra.mxu0 0.0
    %206 = vmatprep.subr.mxu0 0.0
    %207 = vmatpush1.msra.mxu0 0.0
    %208 = vmatprep.subr.mxu0 0.0
    %209 = vmatpush1.msra.mxu0 0.0
    %210 = vmatprep.subr.mxu0 0.0
    %211 = vmatpush1.msra.mxu0 0.0
    %212 = vmatprep.subr.mxu0 0.0
    %213 = vmatpush1.msra.mxu0 0.0
    %214 = vmatprep.subr.mxu0 0.0
    %215 = vmatpush1.msra.mxu0 0.0
    %216 = vmatprep.subr.mxu0 0.0
    %217 = vmatpush1.msra.mxu0 0.0
    %218 = vmatprep.subr.mxu0 0.0
    %219 = vmatpush1.msra.mxu0 0.0
    %220 = vmatprep.subr.mxu0 0.0
    %221 = vmatpush1.msra.mxu0 0.0
    %222 = vmatprep.subr.mxu0 0.0
    %223 = vmatpush1.msra.mxu0 0.0
    %224 = vmatprep.subr.mxu0 0.0
    %225 = vmatpush1.msra.mxu0 0.0
    %226 = vmatprep.subr.mxu0 0.0
    %227 = vmatpush1.msra.mxu0 0.0
    %228 = vmatprep.subr.mxu0 0.0
    %229 = vmatpush1.msra.mxu0 0.0
    %230 = vmatprep.mubr.f32.mxu0 0.0
    %231 = vmatmul.mubr.f32.gmra.mrb[0].mxu0 %v165
    %v232 = vpop.f32.mrb[0].mxu0
    %v233 = vadd.f32 %v94, %v232
    %v234 = vpop.f32.mrb[0].mxu0
    %235 = vdwg.mxu0
    %v236 = vsub.f32 0.0, %v233
    %v237 = vmul.f32 %v236, 1.442695
    %v238 = vpow.pop %v237
    %v239 = vadd.f32 %v238, 1.0
    %v240 = vrcp.pop %v239
    %241 = vst [vmem:[#allocation9] sm:$0xff] %v240
    %v242 = vld [vmem:[#allocation2] sm:$0xff]
    %v243 = vld [vmem:[#allocation8] sm:$0xff]
    %vm244 = vcmask 64512
    %v246 = vsel %vm244, %v243, 0
    %248 = vmatprep.subr.mxu0 0.0
    %249 = vmatpush1.msra.mxu0 %v240
    %250 = vmatprep.subr.mxu0 0.0
    %251 = vmatpush1.msra.mxu0 0.0
    %252 = vmatprep.subr.mxu0 0.0
    %253 = vmatpush1.msra.mxu0 0.0
    %254 = vmatprep.subr.mxu0 0.0
    %255 = vmatpush1.msra.mxu0 0.0
    %256 = vmatprep.subr.mxu0 0.0
    %257 = vmatpush1.msra.mxu0 0.0
    %258 = vmatprep.subr.mxu0 0.0
    %259 = vmatpush1.msra.mxu0 0.0
    %260 = vmatprep.subr.mxu0 0.0
    %261 = vmatpush1.msra.mxu0 0.0
    %262 = vmatprep.subr.mxu0 0.0
    %263 = vmatpush1.msra.mxu0 0.0
    %264 = vmatprep.subr.mxu0 0.0
    %265 = vmatpush1.msra.mxu0 0.0
    %266 = vmatprep.subr.mxu0 0.0
    %267 = vmatpush1.msra.mxu0 0.0
    %268 = vmatprep.subr.mxu0 0.0
    %269 = vmatpush1.msra.mxu0 0.0
    %270 = vmatprep.subr.mxu0 0.0
    %271 = vmatpush1.msra.mxu0 0.0
    %272 = vmatprep.subr.mxu0 0.0
    %273 = vmatpush1.msra.mxu0 0.0
    %274 = vmatprep.subr.mxu0 0.0
    %275 = vmatpush1.msra.mxu0 0.0
    %276 = vmatprep.subr.mxu0 0.0
    %277 = vmatpush1.msra.mxu0 0.0
    %278 = vmatprep.subr.mxu0 0.0
    %279 = vmatpush1.msra.mxu0 0.0
    %280 = vmatprep.subr.mxu0 0.0
    %281 = vmatpush1.msra.mxu0 0.0
    %282 = vmatprep.subr.mxu0 0.0
    %283 = vmatpush1.msra.mxu0 0.0
    %284 = vmatprep.subr.mxu0 0.0
    %285 = vmatpush1.msra.mxu0 0.0
    %286 = vmatprep.subr.mxu0 0.0
    %287 = vmatpush1.msra.mxu0 0.0
    %288 = vmatprep.subr.mxu0 0.0
    %289 = vmatpush1.msra.mxu0 0.0
    %290 = vmatprep.subr.mxu0 0.0
    %291 = vmatpush1.msra.mxu0 0.0
    %292 = vmatprep.subr.mxu0 0.0
    %293 = vmatpush1.msra.mxu0 0.0
    %294 = vmatprep.subr.mxu0 0.0
    %295 = vmatpush1.msra.mxu0 0.0
    %296 = vmatprep.subr.mxu0 0.0
    %297 = vmatpush1.msra.mxu0 0.0
    %298 = vmatprep.subr.mxu0 0.0
    %299 = vmatpush1.msra.mxu0 0.0
    %300 = vmatprep.subr.mxu0 0.0
    %301 = vmatpush1.msra.mxu0 0.0
    %302 = vmatprep.subr.mxu0 0.0
    %303 = vmatpush1.msra.mxu0 0.0
    %304 = vmatprep.subr.mxu0 0.0
    %305 = vmatpush1.msra.mxu0 0.0
    %306 = vmatprep.subr.mxu0 0.0
    %307 = vmatpush1.msra.mxu0 0.0
    %308 = vmatprep.subr.mxu0 0.0
    %309 = vmatpush1.msra.mxu0 0.0
    %310 = vmatprep.subr.mxu0 0.0
    %311 = vmatpush1.msra.mxu0 0.0
    %312 = vmatprep.mubr.f32.mxu0 0.0
    %313 = vmatmul.mubr.f32.gmra.mrb[0].mxu0 %v246
    %v314 = vpop.f32.mrb[0].mxu0
    %v315 = vadd.f32 0.0, %v314
    %v316 = vpop.f32.mrb[0].mxu0
    %317 = vdwg.mxu0
    %v318 = vadd.f32 %v242, %v315
    %319 = vst [vmem:[#allocation2] sm:$0xff] %v318
    // Predicated region
    $region30: #{clutrr_forward.1} parent=1 // pred_check
      %p320 = pneg %p55
    $region31: #{clutrr_forward.1} parent=1 // pred_check_branch
      %322 = sbr.rel (%p320) target = $region33
    $region32: #{clutrr_forward.1} parent=1 // pred_region
      %v323 = vld [vmem:[#allocation2] sm:$0xff]
      %v324 = vlaneseq
      %v325 = vand.u32 %v324, 127
      %vm326 = vcmp.lt.s32.totalorder %v325, 20
      %v327 = vsel %vm326, %v323, -inf
      %328 = vmax.xlane.f32.xlu0 %v327
      %v329 = vpop.xlane.xlu0 %328
      %v330 = vsub.f32 %v327, %v329
      %v331 = vmul.f32 %v330, 1.442695
      %v332 = vpow.pop %v331
      %333 = vadd.xlane.f32.xlu0 %v332
      %v334 = vpop.xlane.xlu0 %333
      %v335 = vrcp.pop %v334
      %v336 = vmul.f32 %v332, %v335
      %337 = vst [vmem:[#allocation10] sm:$0xff] %v336
    $region33: #{clutrr_forward.1} parent=1 // pred_fallthru
      _
    // Predicated region
    $region34: #{clutrr_forward.1} parent=1 // pred_check
      _
    $region35: #{clutrr_forward.1} parent=1 // pred_check_branch
      %339 = sbr.rel (0) target = $region37
    $region36: #{clutrr_forward.1} parent=1 // pred_region
      %s341 = ssub.s32 128, 128
      %342 = vsyncadd [#allocation5], %s341
      %s344 = sshll.u32 [#allocation9], 4
      %s345 = int_to_ptr.vmem [resolvable:$true] %s344
      %347 = dma.vmem_to_hbm [thread:$0]  %s345, 128, %s3, [#allocation5]
    $region37: #{clutrr_forward.1} parent=1 // pred_fallthru
      _
    // Predicated region
    $region38: #{clutrr_forward.1} parent=1 // pred_check
      _
    $region39: #{clutrr_forward.1} parent=1 // pred_check_branch
      %349 = sbr.rel (0) target = $region41
    $region40: #{clutrr_forward.1} parent=1 // pred_region
      %s351 = ssub.s32 128, 128
      %352 = vsyncadd [#allocation11], %s351
      %s354 = sshll.u32 [#allocation10], 4
      %s355 = int_to_ptr.vmem [resolvable:$true] %s354
      %357 = dma.vmem_to_hbm [thread:$0]  %s355, 128, %s4, [#allocation11]
    $region41: #{clutrr_forward.1} parent=1 // pred_fallthru
      _
    // Predicated region
    $region42: #{clutrr_forward.1} parent=1 // pred_check
      _
    $region43: #{clutrr_forward.1} parent=1 // pred_check_branch
      %359 = sbr.rel (0) target = $region45
    $region44: #{clutrr_forward.1} parent=1 // pred_region
      %360 = dma.done [#allocation5], 128
    $region45: #{clutrr_forward.1} parent=1 // pred_fallthru
      _
    // Predicated region
    $region46: #{clutrr_forward.1} parent=1 // pred_check
      _
    $region47: #{clutrr_forward.1} parent=1 // pred_check_branch
      %362 = sbr.rel (0) target = $region49
    $region48: #{clutrr_forward.1} parent=1 // pred_region
      %363 = dma.done [#allocation11], 128
    $region49: #{clutrr_forward.1} parent=1 // pred_fallthru
      _
    %364 = vsyncpa [#allocation4], 1
    %365 = vsyncpa [#allocation7], 1
    %366 = vsyncpa [#allocation5], 1
    %367 = vsyncpa [#allocation11], 1

</llo_original>
